<compile_context>
chip_gen: v7x
topology: tpu7x:2x2x1
jax: 0.10.0
libtpu: 0.0.40
codegen_flags: <defaults>
</compile_context>

<pallas_src>
import functools

import jax
import jax.numpy as jnp
from jax.experimental import pallas as pl
from jax.experimental.pallas import tpu as pltpu


def _basic_block_kernel(x_ref, cache_ref, wlin_ref, wconv_ref, waff_ref, baff_ref,
                        out_ref, cache_out_ref, pad_scratch,
                        *, bb, T, C, C_pad, lorder, lstride):
    # x_ref:         (bb*T, Din)       flattened batch block
    # cache_ref:     (bb, C, D)
    # wlin_ref:      (Din, D)          == W_lin^T
    # wconv_ref:     (lorder, D)       depthwise conv taps per channel
    # waff_ref:      (D, Dout)         == W_aff^T
    # baff_ref:      (1, Dout)
    # out_ref:       (bb*T, Dout)
    # cache_out_ref: (bb, C, D)
    # pad_scratch:   (bb, C_pad + T, D), C_pad = round_up(C, 8) so p is aligned
    D = wlin_ref.shape[-1]

    # LinearTransform (no bias): one MXU matmul for the whole batch block.
    p2d = jnp.dot(x_ref[...], wlin_ref[...],
                  preferred_element_type=jnp.float32)          # (bb*T, D)
    p = p2d.reshape(bb, T, D)

    # new_cache = last C frames of concat(cache, p).  When T >= C it comes
    # entirely from p, so write it straight from registers.
    if T >= C:
        cache_out_ref[...] = p[:, T - C:, :]

    # Stage concat(cache, p) in VMEM.  p's base row is sublane-aligned.
    pad_scratch[:, C_pad - C:C_pad, :] = cache_ref[...]
    pad_scratch[:, C_pad:C_pad + T, :] = p

    if T < C:
        cache_out_ref[...] = pad_scratch[:, C_pad + T - C:C_pad + T, :]

    # Depthwise FSMN memory conv (valid, dilation=lstride, no bias), fused with
    # the residual:  x2 = p + sum_k w[k] * padded[:, k*lstride : k*lstride+T].
    w = wconv_ref[...]                                          # taps, loaded once
    x2 = p
    base = C_pad - C
    for k in range(lorder):
        off = base + k * lstride
        x2 = x2 + pad_scratch[:, off:off + T, :] * w[k:k + 1, :]

    # AffineTransform + ReLU on the flat (bb*T, D) slab (second MXU matmul).
    y = jnp.dot(x2.reshape(bb * T, D), waff_ref[...],
                preferred_element_type=jnp.float32) + baff_ref[...]
    out_ref[...] = jnp.maximum(y, 0.0)


@functools.partial(jax.jit, static_argnames=("lorder", "lstride", "batch_block"))
def basic_block_forward(x, cache_nchw, w_lin, w_conv, w_aff, b_aff,
                        *, lorder, lstride, batch_block=None):
    """x: [B, T, Din]; cache_nchw: [B, D, C, 1] (torch layout).

    Returns (out [B, T, Din], new_cache [B, D, C, 1])."""
    B, T, Din = x.shape
    D = w_lin.shape[0]          # proj_dim ; w_lin: [D, Din] (torch Linear layout)
    Dout = w_aff.shape[0]       # linear_dim ; w_aff: [Dout, D]
    C = cache_nchw.shape[2]

    # Batch block per grid step: default = whole batch (single grid step).
    bb = B if batch_block is None else min(batch_block, B)
    assert B % bb == 0, "batch_block must divide B"
    assert T % 8 == 0, "T should be a multiple of 8 for free (bb,T,D) reshapes"
    num_blocks = B // bb
    C_pad = -(-C // 8) * 8      # round up to a sublane boundary

    # glue: layout conversion + transposed weights (wrapper-side only)
    cache_btd = jnp.transpose(cache_nchw[..., 0], (0, 2, 1))    # [B, C, D]
    wlin_t = w_lin.T                                            # [Din, D]
    waff_t = w_aff.T                                            # [D, Dout]
    wconv = jnp.transpose(w_conv[:, 0, :, 0], (1, 0))           # [lorder, D]
    baff = b_aff.reshape(1, Dout)
    x2d = x.reshape(B * T, Din)                                 # fold B into M

    kernel = functools.partial(_basic_block_kernel, bb=bb, T=T, C=C,
                               C_pad=C_pad, lorder=lorder, lstride=lstride)

    out2d, new_cache = pl.pallas_call(
        kernel,
        out_shape=(
            jax.ShapeDtypeStruct((B * T, Dout), jnp.float32),
            jax.ShapeDtypeStruct((B, C, D), jnp.float32),
        ),
        grid_spec=pltpu.PrefetchScalarGridSpec(
            num_scalar_prefetch=0,
            grid=(num_blocks,),
            in_specs=[
                pl.BlockSpec((bb * T, Din), lambda i: (i, 0)),
                pl.BlockSpec((bb, C, D), lambda i: (i, 0, 0)),
                pl.BlockSpec((Din, D), lambda i: (0, 0)),
                pl.BlockSpec((lorder, D), lambda i: (0, 0)),
                pl.BlockSpec((D, Dout), lambda i: (0, 0)),
                pl.BlockSpec((1, Dout), lambda i: (0, 0)),
            ],
            out_specs=[
                pl.BlockSpec((bb * T, Dout), lambda i: (i, 0)),
                pl.BlockSpec((bb, C, D), lambda i: (i, 0, 0)),
            ],
            scratch_shapes=[pltpu.VMEM((bb, C_pad + T, D), jnp.float32)],
        ),
        compiler_params=pltpu.CompilerParams(
            dimension_semantics=("parallel",)),
        # reuse the (intermediate) cache buffer for the new cache
        input_output_aliases={1: 1},
    )(x2d, cache_btd, wlin_t, wconv, waff_t, baff)

    out = out2d.reshape(B, T, Dout)
    # back to torch cache layout [B, D, C, 1]
    new_cache_nchw = jnp.transpose(new_cache, (0, 2, 1))[..., None]
    return out, new_cache_nchw


def reference_forward(x, cache_nchw, w_lin, w_conv, w_aff, b_aff,
                      *, lorder, lstride):
    """Pure-JAX reference mirroring the PyTorch module exactly."""
    p = jnp.einsum("btd,pd->btp", x, w_lin)                      # LinearTransform
    cache_btd = jnp.transpose(cache_nchw[..., 0], (0, 2, 1))     # [B, C, D]
    padded = jnp.concatenate([cache_btd, p], axis=1)             # [B, C+T, D]
    C = cache_btd.shape[1]
    T = x.shape[1]
    new_cache = padded[:, -C:, :]
    wconv = jnp.transpose(w_conv[:, 0, :, 0], (1, 0))            # [lorder, D]
    conv = jnp.zeros_like(p)
    for k in range(lorder):
        conv = conv + padded[:, k * lstride:k * lstride + T, :] * wconv[k][None, None, :]
    x2 = p + conv
    y = jnp.einsum("btp,op->bto", x2, w_aff) + b_aff[None, None, :]
    out = jnp.maximum(y, 0.0)
    return out, jnp.transpose(new_cache, (0, 2, 1))[..., None]


if __name__ == "__main__":
    # BasicBlock(linear_dim=32, proj_dim=16, lorder=4, rorder=1, lstride=1, rstride=1, stack_layer=0)
    B, T = 2, 8
    linear_dim, proj_dim = 32, 16
    lorder, lstride = 4, 1
    C = (lorder - 1) * lstride   # cache length so FSMN "valid" conv output length == T

    key = jax.random.PRNGKey(0)
    k1, k2, k3, k4, k5, k6 = jax.random.split(key, 6)

    x = jax.random.normal(k1, (B, T, linear_dim), dtype=jnp.float32)
    in_cache = jax.random.normal(k2, (B, proj_dim, C, 1), dtype=jnp.float32)

    # Deterministic parameter init (shapes match the PyTorch module)
    w_lin = jax.random.normal(k3, (proj_dim, linear_dim), dtype=jnp.float32) * 0.1    # LinearTransform
    w_conv = jax.random.normal(k4, (proj_dim, 1, lorder, 1), dtype=jnp.float32) * 0.1  # depthwise Conv2d
    w_aff = jax.random.normal(k5, (linear_dim, proj_dim), dtype=jnp.float32) * 0.1     # AffineTransform weight
    b_aff = jax.random.normal(k6, (linear_dim,), dtype=jnp.float32) * 0.1              # AffineTransform bias

    out, new_cache = basic_block_forward(
        x, in_cache, w_lin, w_conv, w_aff, b_aff, lorder=lorder, lstride=lstride)
    out = jax.block_until_ready(out)
    new_cache = jax.block_until_ready(new_cache)

    ref_out, ref_cache = reference_forward(
        x, in_cache, w_lin, w_conv, w_aff, b_aff, lorder=lorder, lstride=lstride)

    assert out.shape == (B, T, linear_dim)
    assert new_cache.shape == (B, proj_dim, C, 1)
    assert jnp.allclose(out, ref_out, atol=1e-5, rtol=1e-5)
    assert jnp.allclose(new_cache, ref_cache, atol=1e-5, rtol=1e-5)

    print("KERNEL_OK")
</pallas_src>

<mosaic_0001>
module attributes {stable_mosaic.version = 11 : i64} {
  func.func @_basic_block_kernel(%arg0: i32, %arg1: memref<16x32xf32, #tpu.memory_space<vmem>>, %arg2: memref<2x3x16xf32, #tpu.memory_space<vmem>>, %arg3: memref<32x16xf32, #tpu.memory_space<vmem>>, %arg4: memref<4x16xf32, #tpu.memory_space<vmem>>, %arg5: memref<16x32xf32, #tpu.memory_space<vmem>>, %arg6: memref<1x32xf32, #tpu.memory_space<vmem>>, %arg7: memref<16x32xf32, #tpu.memory_space<vmem>>, %arg8: memref<2x3x16xf32, #tpu.memory_space<vmem>>, %arg9: memref<2x16x16xf32, #tpu.memory_space<vmem>>) attributes {dimension_semantics = [#tpu.dimension_semantics<parallel>], iteration_bounds = array<i64: 1>, scalar_prefetch = 0 : i64, scratch_operands = 1 : i64, tpu.core_type = #tpu.core_type<tc>, window_params = [{transform_indices = @transform_0, window_bounds = array<i64: 16, 32>}, {transform_indices = @transform_1, window_bounds = array<i64: 2, 3, 16>}, {pipeline_mode = #tpu.pipeline_mode<synchronous>, transform_indices = @transform_2, window_bounds = array<i64: 32, 16>}, {pipeline_mode = #tpu.pipeline_mode<synchronous>, transform_indices = @transform_3, window_bounds = array<i64: 4, 16>}, {pipeline_mode = #tpu.pipeline_mode<synchronous>, transform_indices = @transform_4, window_bounds = array<i64: 16, 32>}, {pipeline_mode = #tpu.pipeline_mode<synchronous>, transform_indices = @transform_5, window_bounds = array<i64: 1, 32>}, {transform_indices = @transform_6, window_bounds = array<i64: 16, 32>}, {transform_indices = @transform_7, window_bounds = array<i64: 2, 3, 16>}]} {
    %c0 = arith.constant 0 : index
    %c0_0 = arith.constant 0 : index
    %0 = vector.load %arg1[%c0, %c0_0] : memref<16x32xf32, #tpu.memory_space<vmem>>, vector<16x32xf32>
    %c0_1 = arith.constant 0 : index
    %c0_2 = arith.constant 0 : index
    %1 = vector.load %arg3[%c0_1, %c0_2] : memref<32x16xf32, #tpu.memory_space<vmem>>, vector<32x16xf32>
    %cst = arith.constant dense<0.000000e+00> : vector<16x16xf32>
    %2 = tpu.matmul %0, %1, %cst {dimension_numbers = #tpu.dot_dimension_numbers<[1], [0], [0], [1], [0, 0, 1, 1], [], []>} : vector<16x32xf32>, vector<32x16xf32>, vector<16x16xf32> -> vector<16x16xf32>
    %3 = vector.shape_cast %2 : vector<16x16xf32> to vector<2x8x16xf32>
    %4 = vector.extract_strided_slice %3 {offsets = [0, 5, 0], sizes = [2, 3, 16], strides = [1, 1, 1]} : vector<2x8x16xf32> to vector<2x3x16xf32>
    %c0_3 = arith.constant 0 : index
    %c0_4 = arith.constant 0 : index
    %c0_5 = arith.constant 0 : index
    %5 = vector.load %arg8[%c0_3, %c0_4, %c0_5] : memref<2x3x16xf32, #tpu.memory_space<vmem>>, vector<2x3x16xf32>
    tpu.vector_store %arg8[%c0_3, %c0_4, %c0_5], %4 {strides = array<i32>} : memref<2x3x16xf32, #tpu.memory_space<vmem>>, vector<2x3x16xf32>,
    %c0_6 = arith.constant 0 : index
    %c0_7 = arith.constant 0 : index
    %c0_8 = arith.constant 0 : index
    %6 = vector.load %arg2[%c0_6, %c0_7, %c0_8] : memref<2x3x16xf32, #tpu.memory_space<vmem>>, vector<2x3x16xf32>
    %c0_9 = arith.constant 0 : index
    %c5 = arith.constant 5 : index
    %c0_10 = arith.constant 0 : index
    %7 = vector.load %arg9[%c0_9, %c5, %c0_10] : memref<2x16x16xf32, #tpu.memory_space<vmem>>, vector<2x3x16xf32>
    tpu.vector_store %arg9[%c0_9, %c5, %c0_10], %6 {strides = array<i32>} : memref<2x16x16xf32, #tpu.memory_space<vmem>>, vector<2x3x16xf32>,
    %c0_11 = arith.constant 0 : index
    %c8 = arith.constant 8 : index
    %c0_12 = arith.constant 0 : index
    %8 = vector.load %arg9[%c0_11, %c8, %c0_12] : memref<2x16x16xf32, #tpu.memory_space<vmem>>, vector<2x8x16xf32>
    tpu.vector_store %arg9[%c0_11, %c8, %c0_12], %3 {strides = array<i32>} : memref<2x16x16xf32, #tpu.memory_space<vmem>>, vector<2x8x16xf32>,
    %c0_13 = arith.constant 0 : index
    %c0_14 = arith.constant 0 : index
    %9 = vector.load %arg4[%c0_13, %c0_14] : memref<4x16xf32, #tpu.memory_space<vmem>>, vector<4x16xf32>
    %c0_15 = arith.constant 0 : index
    %c5_16 = arith.constant 5 : index
    %c0_17 = arith.constant 0 : index
    %10 = vector.load %arg9[%c0_15, %c5_16, %c0_17] : memref<2x16x16xf32, #tpu.memory_space<vmem>>, vector<2x8x16xf32>
    %11 = vector.extract_strided_slice %9 {offsets = [0, 0], sizes = [1, 16], strides = [1, 1]} : vector<4x16xf32> to vector<1x16xf32>
    %12 = vector.shape_cast %11 : vector<1x16xf32> to vector<1x1x16xf32>
    %13 = vector.broadcast %12 : vector<1x1x16xf32> to vector<2x8x16xf32>
    %14 = arith.mulf %10, %13 : vector<2x8x16xf32>
    %15 = arith.addf %3, %14 : vector<2x8x16xf32>
    %c0_18 = arith.constant 0 : index
    %c6 = arith.constant 6 : index
    %c0_19 = arith.constant 0 : index
    %16 = vector.load %arg9[%c0_18, %c6, %c0_19] : memref<2x16x16xf32, #tpu.memory_space<vmem>>, vector<2x8x16xf32>
    %17 = vector.extract_strided_slice %9 {offsets = [1, 0], sizes = [1, 16], strides = [1, 1]} : vector<4x16xf32> to vector<1x16xf32>
    %18 = vector.shape_cast %17 : vector<1x16xf32> to vector<1x1x16xf32>
    %19 = vector.broadcast %18 : vector<1x1x16xf32> to vector<2x8x16xf32>
    %20 = arith.mulf %16, %19 : vector<2x8x16xf32>
    %21 = arith.addf %15, %20 : vector<2x8x16xf32>
    %c0_20 = arith.constant 0 : index
    %c7 = arith.constant 7 : index
    %c0_21 = arith.constant 0 : index
    %22 = vector.load %arg9[%c0_20, %c7, %c0_21] : memref<2x16x16xf32, #tpu.memory_space<vmem>>, vector<2x8x16xf32>
    %23 = vector.extract_strided_slice %9 {offsets = [2, 0], sizes = [1, 16], strides = [1, 1]} : vector<4x16xf32> to vector<1x16xf32>
    %24 = vector.shape_cast %23 : vector<1x16xf32> to vector<1x1x16xf32>
    %25 = vector.broadcast %24 : vector<1x1x16xf32> to vector<2x8x16xf32>
    %26 = arith.mulf %22, %25 : vector<2x8x16xf32>
    %27 = arith.addf %21, %26 : vector<2x8x16xf32>
    %c0_22 = arith.constant 0 : index
    %c8_23 = arith.constant 8 : index
    %c0_24 = arith.constant 0 : index
    %28 = vector.load %arg9[%c0_22, %c8_23, %c0_24] : memref<2x16x16xf32, #tpu.memory_space<vmem>>, vector<2x8x16xf32>
    %29 = vector.extract_strided_slice %9 {offsets = [3, 0], sizes = [1, 16], strides = [1, 1]} : vector<4x16xf32> to vector<1x16xf32>
    %30 = vector.shape_cast %29 : vector<1x16xf32> to vector<1x1x16xf32>
    %31 = vector.broadcast %30 : vector<1x1x16xf32> to vector<2x8x16xf32>
    %32 = arith.mulf %28, %31 : vector<2x8x16xf32>
    %33 = arith.addf %27, %32 : vector<2x8x16xf32>
    %34 = vector.shape_cast %33 : vector<2x8x16xf32> to vector<16x16xf32>
    %c0_25 = arith.constant 0 : index
    %c0_26 = arith.constant 0 : index
    %35 = vector.load %arg5[%c0_25, %c0_26] : memref<16x32xf32, #tpu.memory_space<vmem>>, vector<16x32xf32>
    %cst_27 = arith.constant dense<0.000000e+00> : vector<16x32xf32>
    %36 = tpu.matmul %34, %35, %cst_27 {dimension_numbers = #tpu.dot_dimension_numbers<[1], [0], [0], [1], [0, 0, 1, 1], [], []>} : vector<16x16xf32>, vector<16x32xf32>, vector<16x32xf32> -> vector<16x32xf32>
    %c0_28 = arith.constant 0 : index
    %c0_29 = arith.constant 0 : index
    %37 = vector.load %arg6[%c0_28, %c0_29] : memref<1x32xf32, #tpu.memory_space<vmem>>, vector<1x32xf32>
    %38 = vector.broadcast %37 : vector<1x32xf32> to vector<16x32xf32>
    %39 = arith.addf %36, %38 : vector<16x32xf32>
    %cst_30 = arith.constant 0.000000e+00 : f32
    %40 = vector.broadcast %cst_30 : f32 to vector<16x32xf32>
    %41 = arith.maximumf %39, %40 : vector<16x32xf32>
    %c0_31 = arith.constant 0 : index
    %c0_32 = arith.constant 0 : index
    %42 = vector.load %arg7[%c0_31, %c0_32] : memref<16x32xf32, #tpu.memory_space<vmem>>, vector<16x32xf32>
    tpu.vector_store %arg7[%c0_31, %c0_32], %41 {strides = array<i32>} : memref<16x32xf32, #tpu.memory_space<vmem>>, vector<16x32xf32>,
    return
  }
  func.func @transform_0(%arg0: i32) -> (i32, i32) {
    %c0_i32 = arith.constant 0 : i32
    %c0_i32_0 = arith.constant 0 : i32
    return %arg0, %c0_i32 : i32, i32
  }
  func.func @transform_1(%arg0: i32) -> (i32, i32, i32) {
    %c0_i32 = arith.constant 0 : i32
    %c0_i32_0 = arith.constant 0 : i32
    %c0_i32_1 = arith.constant 0 : i32
    return %arg0, %c0_i32, %c0_i32_0 : i32, i32, i32
  }
  func.func @transform_2(%arg0: i32) -> (i32, i32) {
    %c0_i32 = arith.constant 0 : i32
    %c0_i32_0 = arith.constant 0 : i32
    %c0_i32_1 = arith.constant 0 : i32
    return %c0_i32, %c0_i32_0 : i32, i32
  }
  func.func @transform_3(%arg0: i32) -> (i32, i32) {
    %c0_i32 = arith.constant 0 : i32
    %c0_i32_0 = arith.constant 0 : i32
    %c0_i32_1 = arith.constant 0 : i32
    return %c0_i32, %c0_i32_0 : i32, i32
  }
  func.func @transform_4(%arg0: i32) -> (i32, i32) {
    %c0_i32 = arith.constant 0 : i32
    %c0_i32_0 = arith.constant 0 : i32
    %c0_i32_1 = arith.constant 0 : i32
    return %c0_i32, %c0_i32_0 : i32, i32
  }
  func.func @transform_5(%arg0: i32) -> (i32, i32) {
    %c0_i32 = arith.constant 0 : i32
    %c0_i32_0 = arith.constant 0 : i32
    %c0_i32_1 = arith.constant 0 : i32
    return %c0_i32, %c0_i32_0 : i32, i32
  }
  func.func @transform_6(%arg0: i32) -> (i32, i32) {
    %c0_i32 = arith.constant 0 : i32
    %c0_i32_0 = arith.constant 0 : i32
    return %arg0, %c0_i32 : i32, i32
  }
  func.func @transform_7(%arg0: i32) -> (i32, i32, i32) {
    %c0_i32 = arith.constant 0 : i32
    %c0_i32_0 = arith.constant 0 : i32
    %c0_i32_1 = arith.constant 0 : i32
    return %arg0, %c0_i32, %c0_i32_0 : i32, i32, i32
  }
}

</mosaic_0001>

<llo_original>
// kernel: basic_block_forward.1
$region0: #{basic_block_forward.1}
  #allocation0 [shape = 'u32[]', space=smem, size = 0x4, offset = 0x4, fixed_abs, tag = 'smem constant byte address 0x4 - core index']
  #allocation1 [shape = 'u32[144,128]{1,0:T(1,128)}', space=vmem, size = 0x12000, scoped, tag = 'internal scratch']
  #allocation2 [shape = 'f32[2,16,16]{2,1,0:T(8,128)}', space=vmem, size = 0x4000, scoped, tag = 'scratch operand']
  %s0 = inlined_call_operand.vmem [shape: f32[16,32], index: 0, kind: input, shape index: {}]
  %s1 = inlined_call_operand.vmem [shape: f32[2,3,16], index: 1, kind: input, shape index: {}, may-alias: {1,7}]
  %s2 = inlined_call_operand.vmem [shape: f32[32,16], index: 2, kind: input, shape index: {}]
  %s3 = inlined_call_operand.vmem [shape: f32[4,16], index: 3, kind: input, shape index: {}]
  %s4 = inlined_call_operand.vmem [shape: f32[16,32], index: 4, kind: input, shape index: {}]
  %s5 = inlined_call_operand.vmem [shape: f32[1,32], index: 5, kind: input, shape index: {}]
  %s6 = inlined_call_operand.hbm [shape: f32[16,32], index: 6, kind: output, shape index: {0}]
  %s7 = inlined_call_operand.vmem [shape: f32[2,3,16], index: 7, kind: output, shape index: {1}, may-alias: {1,7}]
  %8 = xla_tuple %s6, %s7
  %s9 = sld [smem:[#allocation0]]
  $region42: #{basic_block_forward.1} parent=0
    _
  %s11 = ssub.s32 1, %s9
  %s12 = scalar_select 0, %s11, %s9
  $region1: #{basic_block_forward.1} parent=0
    #allocation3 [shape = 'u8[8192]{0}', space=vmem, size = 0x2000, scoped, tag = 'output window, operand 0, single buffered']
    #allocation4 [shape = 's32[1]{0}', space=sflag, size = 0x4, scoped, tag = 'scoped memory for basic_block_forward.1']
    %13 = vsyncpa [#allocation4], 0
    // Predicated region
    $region2: #{basic_block_forward.1} parent=1 // pred_check
      _
    $region3: #{basic_block_forward.1} parent=1 // pred_check_branch
      %15 = sbr.rel (0) target = $region5
    $region4: #{basic_block_forward.1} parent=1 // pred_region
      _
    $region5: #{basic_block_forward.1} parent=1 // pred_fallthru
      _
    // Predicated region
    $region6: #{basic_block_forward.1} parent=1 // pred_check
      _
    $region7: #{basic_block_forward.1} parent=1 // pred_check_branch
      %17 = sbr.rel (0) target = $region9
    $region8: #{basic_block_forward.1} parent=1 // pred_region
      _
    $region9: #{basic_block_forward.1} parent=1 // pred_fallthru
      _
    // Predicated region
    $region10: #{basic_block_forward.1} parent=1 // pred_check
      _
    $region11: #{basic_block_forward.1} parent=1 // pred_check_branch
      %19 = sbr.rel (0) target = $region13
    $region12: #{basic_block_forward.1} parent=1 // pred_region
      _
    $region13: #{basic_block_forward.1} parent=1 // pred_fallthru
      _
    // Predicated region
    $region14: #{basic_block_forward.1} parent=1 // pred_check
      _
    $region15: #{basic_block_forward.1} parent=1 // pred_check_branch
      %21 = sbr.rel (0) target = $region17
    $region16: #{basic_block_forward.1} parent=1 // pred_region
      _
    $region17: #{basic_block_forward.1} parent=1 // pred_fallthru
      _
    // Predicated region
    $region18: #{basic_block_forward.1} parent=1 // pred_check
      _
    $region19: #{basic_block_forward.1} parent=1 // pred_check_branch
      %23 = sbr.rel (0) target = $region21
    $region20: #{basic_block_forward.1} parent=1 // pred_region
      _
    $region21: #{basic_block_forward.1} parent=1 // pred_fallthru
      _
    // Predicated region
    $region22: #{basic_block_forward.1} parent=1 // pred_check
      _
    $region23: #{basic_block_forward.1} parent=1 // pred_check_branch
      %25 = sbr.rel (0) target = $region25
    $region24: #{basic_block_forward.1} parent=1 // pred_region
      _
    $region25: #{basic_block_forward.1} parent=1 // pred_fallthru
      _
    %v26 = vld [vmem:[%s0] sm:$0xff]
    %v27 = vld [vmem:[%s0 + $0x8] sm:$0xff]
    %v28 = vld [vmem:[%s2] sm:$0xff]
    %v29 = vld [vmem:[%s2 + $0x8] sm:$0xff]
    %v30 = vld [vmem:[%s2 + $0x10] sm:$0xff]
    %v31 = vld [vmem:[%s2 + $0x18] sm:$0xff]
    %vm32 = vcmask 261120
    %v34 = vsel %vm32, %v26, 0
    %v37 = vsel %vm32, %v27, 0
    %39 = vmatprep.subr.mxu0 0.0
    %40 = vmatpush1.msra.mxu0 %v28
    %41 = vmatprep.subr.mxu0 0.0
    %42 = vmatpush1.msra.mxu0 %v29
    %43 = vmatprep.subr.mxu0 0.0
    %44 = vmatpush1.msra.mxu0 %v30
    %45 = vmatprep.subr.mxu0 0.0
    %46 = vmatpush1.msra.mxu0 %v31
    %47 = vmatprep.subr.mxu0 0.0
    %48 = vmatpush1.msra.mxu0 0.0
    %49 = vmatprep.subr.mxu0 0.0
    %50 = vmatpush1.msra.mxu0 0.0
    %51 = vmatprep.subr.mxu0 0.0
    %52 = vmatpush1.msra.mxu0 0.0
    %53 = vmatprep.subr.mxu0 0.0
    %54 = vmatpush1.msra.mxu0 0.0
    %55 = vmatprep.subr.mxu0 0.0
    %56 = vmatpush1.msra.mxu0 0.0
    %57 = vmatprep.subr.mxu0 0.0
    %58 = vmatpush1.msra.mxu0 0.0
    %59 = vmatprep.subr.mxu0 0.0
    %60 = vmatpush1.msra.mxu0 0.0
    %61 = vmatprep.subr.mxu0 0.0
    %62 = vmatpush1.msra.mxu0 0.0
    %63 = vmatprep.subr.mxu0 0.0
    %64 = vmatpush1.msra.mxu0 0.0
    %65 = vmatprep.subr.mxu0 0.0
    %66 = vmatpush1.msra.mxu0 0.0
    %67 = vmatprep.subr.mxu0 0.0
    %68 = vmatpush1.msra.mxu0 0.0
    %69 = vmatprep.subr.mxu0 0.0
    %70 = vmatpush1.msra.mxu0 0.0
    %71 = vmatprep.subr.mxu0 0.0
    %72 = vmatpush1.msra.mxu0 0.0
    %73 = vmatprep.subr.mxu0 0.0
    %74 = vmatpush1.msra.mxu0 0.0
    %75 = vmatprep.subr.mxu0 0.0
    %76 = vmatpush1.msra.mxu0 0.0
    %77 = vmatprep.subr.mxu0 0.0
    %78 = vmatpush1.msra.mxu0 0.0
    %79 = vmatprep.subr.mxu0 0.0
    %80 = vmatpush1.msra.mxu0 0.0
    %81 = vmatprep.subr.mxu0 0.0
    %82 = vmatpush1.msra.mxu0 0.0
    %83 = vmatprep.subr.mxu0 0.0
    %84 = vmatpush1.msra.mxu0 0.0
    %85 = vmatprep.subr.mxu0 0.0
    %86 = vmatpush1.msra.mxu0 0.0
    %87 = vmatprep.subr.mxu0 0.0
    %88 = vmatpush1.msra.mxu0 0.0
    %89 = vmatprep.subr.mxu0 0.0
    %90 = vmatpush1.msra.mxu0 0.0
    %91 = vmatprep.subr.mxu0 0.0
    %92 = vmatpush1.msra.mxu0 0.0
    %93 = vmatprep.subr.mxu0 0.0
    %94 = vmatpush1.msra.mxu0 0.0
    %95 = vmatprep.subr.mxu0 0.0
    %96 = vmatpush1.msra.mxu0 0.0
    %97 = vmatprep.subr.mxu0 0.0
    %98 = vmatpush1.msra.mxu0 0.0
    %99 = vmatprep.subr.mxu0 0.0
    %100 = vmatpush1.msra.mxu0 0.0
    %101 = vmatprep.subr.mxu0 0.0
    %102 = vmatpush1.msra.mxu0 0.0
    %103 = vmatprep.mubr.f32.mxu0 0.0
    %104 = vmatmul.mubr.f32.gmra.mrb[0].mxu0 %v34
    %v105 = vpop.f32.mrb[0].mxu0
    %v106 = vadd.f32 0.0, %v105
    %v107 = vpop.f32.mrb[0].mxu0
    %108 = vmatprep.mubr.f32.mxu0 0.0
    %109 = vmatmul.mubr.f32.gmra.mrb[0].mxu0 %v37
    %v110 = vpop.f32.mrb[0].mxu0
    %v111 = vadd.f32 0.0, %v110
    %v112 = vpop.f32.mrb[0].mxu0
    %113 = vdwg.mxu0
    %vm114 = vcmask 130053
    %115 = vst.msk [vmem:[%s7 - $0x5] sm:$0xe0] %vm114, %v106
    %116 = vst.msk [vmem:[%s7 - $0x1] sm:$0xe0] %vm114, %v111
    %v117 = vld [vmem:[%s1] sm:$0x7]
    %v118 = vld [vmem:[%s1 + $0x4] sm:$0x7]
    %vm119 = vcmask 124928
    %120 = vst.msk [vmem:[#allocation2 + $0x5] sm:$0x7] %vm119, %v117
    %121 = vst.msk [vmem:[#allocation2 + $0x15] sm:$0x7] %vm119, %v118
    %vm122 = vcmask 130048
    %123 = vst.msk [vmem:[#allocation2 + $0x8] sm:$0xff] %vm122, %v106
    %124 = vst.msk [vmem:[#allocation2 + $0x18] sm:$0xff] %vm122, %v111
    %v125 = vld [vmem:[%s3] sm:$0xf]
    %v126 = vld [vmem:[#allocation2 + $0x5] sm:$0xff]
    %v127 = vld [vmem:[#allocation2 + $0x15] sm:$0xff]
    %v128 = vlaneseq
    %v129 = vshrl.u32 %v128, 7
    %v130 = vsub.s32 0, %v129
    %v131 = vrot.slane %v125, %v130
    %v132 = vmul.f32 %v126, %v131
    %v133 = vmul.f32 %v127, %v131
    %v134 = vadd.f32 %v106, %v132
    %v135 = vadd.f32 %v111, %v133
    %v136 = vld [vmem:[#allocation2 + $0x6] sm:$0xff]
    %v137 = vld [vmem:[#allocation2 + $0x16] sm:$0xff]
    %v138 = vlaneseq
    %v139 = vshrl.u32 %v138, 7
    %v140 = vsub.s32 1, %v139
    %v141 = vrot.slane %v125, %v140
    %v142 = vmul.f32 %v136, %v141
    %v143 = vmul.f32 %v137, %v141
    %v144 = vadd.f32 %v134, %v142
    %v145 = vadd.f32 %v135, %v143
    %v146 = vld [vmem:[#allocation2 + $0x7] sm:$0xff]
    %v147 = vld [vmem:[#allocation2 + $0x17] sm:$0xff]
    %v148 = vlaneseq
    %v149 = vshrl.u32 %v148, 7
    %v150 = vsub.s32 2, %v149
    %v151 = vrot.slane %v125, %v150
    %v152 = vmul.f32 %v146, %v151
    %v153 = vmul.f32 %v147, %v151
    %v154 = vadd.f32 %v144, %v152
    %v155 = vadd.f32 %v145, %v153
    %v156 = vld [vmem:[#allocation2 + $0x8] sm:$0xff]
    %v157 = vld [vmem:[#allocation2 + $0x18] sm:$0xff]
    %v158 = vlaneseq
    %v159 = vshrl.u32 %v158, 7
    %v160 = vsub.s32 3, %v159
    %v161 = vrot.slane %v125, %v160
    %v162 = vmul.f32 %v156, %v161
    %v163 = vmul.f32 %v157, %v161
    %v164 = vadd.f32 %v154, %v162
    %v165 = vadd.f32 %v155, %v163
    %v166 = vld [vmem:[%s4] sm:$0xff]
    %v167 = vld [vmem:[%s4 + $0x8] sm:$0xff]
    %v168 = vld [vmem:[%s5] sm:$0x1]
    %v170 = vlaneseq
    %v171 = vshrl.u32 %v170, 7
    %v172 = vsub.s32 0, %v171
    %v173 = vrot.slane %v168, %v172
    %v176 = vsel %vm122, %v164, 0
    %v179 = vsel %vm122, %v165, 0
    %181 = vmatprep.subr.mxu0 0.0
    %182 = vmatpush1.msra.mxu0 %v166
    %183 = vmatprep.subr.mxu0 0.0
    %184 = vmatpush1.msra.mxu0 %v167
    %185 = vmatprep.subr.mxu0 0.0
    %186 = vmatpush1.msra.mxu0 0.0
    %187 = vmatprep.subr.mxu0 0.0
    %188 = vmatpush1.msra.mxu0 0.0
    %189 = vmatprep.subr.mxu0 0.0
    %190 = vmatpush1.msra.mxu0 0.0
    %191 = vmatprep.subr.mxu0 0.0
    %192 = vmatpush1.msra.mxu0 0.0
    %193 = vmatprep.subr.mxu0 0.0
    %194 = vmatpush1.msra.mxu0 0.0
    %195 = vmatprep.subr.mxu0 0.0
    %196 = vmatpush1.msra.mxu0 0.0
    %197 = vmatprep.subr.mxu0 0.0
    %198 = vmatpush1.msra.mxu0 0.0
    %199 = vmatprep.subr.mxu0 0.0
    %200 = vmatpush1.msra.mxu0 0.0
    %201 = vmatprep.subr.mxu0 0.0
    %202 = vmatpush1.msra.mxu0 0.0
    %203 = vmatprep.subr.mxu0 0.0
    %204 = vmatpush1.msra.mxu0 0.0
    %205 = vmatprep.subr.mxu0 0.0
    %206 = vmatpush1.msra.mxu0 0.0
    %207 = vmatprep.subr.mxu0 0.0
    %208 = vmatpush1.msra.mxu0 0.0
    %209 = vmatprep.subr.mxu0 0.0
    %210 = vmatpush1.msra.mxu0 0.0
    %211 = vmatprep.subr.mxu0 0.0
    %212 = vmatpush1.msra.mxu0 0.0
    %213 = vmatprep.subr.mxu0 0.0
    %214 = vmatpush1.msra.mxu0 0.0
    %215 = vmatprep.subr.mxu0 0.0
    %216 = vmatpush1.msra.mxu0 0.0
    %217 = vmatprep.subr.mxu0 0.0
    %218 = vmatpush1.msra.mxu0 0.0
    %219 = vmatprep.subr.mxu0 0.0
    %220 = vmatpush1.msra.mxu0 0.0
    %221 = vmatprep.subr.mxu0 0.0
    %222 = vmatpush1.msra.mxu0 0.0
    %223 = vmatprep.subr.mxu0 0.0
    %224 = vmatpush1.msra.mxu0 0.0
    %225 = vmatprep.subr.mxu0 0.0
    %226 = vmatpush1.msra.mxu0 0.0
    %227 = vmatprep.subr.mxu0 0.0
    %228 = vmatpush1.msra.mxu0 0.0
    %229 = vmatprep.subr.mxu0 0.0
    %230 = vmatpush1.msra.mxu0 0.0
    %231 = vmatprep.subr.mxu0 0.0
    %232 = vmatpush1.msra.mxu0 0.0
    %233 = vmatprep.subr.mxu0 0.0
    %234 = vmatpush1.msra.mxu0 0.0
    %235 = vmatprep.subr.mxu0 0.0
    %236 = vmatpush1.msra.mxu0 0.0
    %237 = vmatprep.subr.mxu0 0.0
    %238 = vmatpush1.msra.mxu0 0.0
    %239 = vmatprep.subr.mxu0 0.0
    %240 = vmatpush1.msra.mxu0 0.0
    %241 = vmatprep.subr.mxu0 0.0
    %242 = vmatpush1.msra.mxu0 0.0
    %243 = vmatprep.subr.mxu0 0.0
    %244 = vmatpush1.msra.mxu0 0.0
    %245 = vmatprep.mubr.f32.mxu0 0.0
    %246 = vmatmul.mubr.f32.gmra.mrb[0].mxu0 %v176
    %v247 = vpop.f32.mrb[0].mxu0
    %v248 = vadd.f32 %v173, %v247
    %v249 = vpop.f32.mrb[0].mxu0
    %250 = vmatprep.mubr.f32.mxu0 0.0
    %251 = vmatmul.mubr.f32.gmra.mrb[0].mxu0 %v179
    %v252 = vpop.f32.mrb[0].mxu0
    %v253 = vadd.f32 %v173, %v252
    %v254 = vpop.f32.mrb[0].mxu0
    %255 = vdwg.mxu0
    %v256 = vmax.f32 %v248, 0.0
    %v257 = vmax.f32 %v253, 0.0
    %258 = vst.msk [vmem:[#allocation3] sm:$0xff] %vm32, %v256
    %259 = vst.msk [vmem:[#allocation3 + $0x8] sm:$0xff] %vm32, %v257
    // Predicated region
    $region26: #{basic_block_forward.1} parent=1 // pred_check
      _
    $region27: #{basic_block_forward.1} parent=1 // pred_check_branch
      %261 = sbr.rel (0) target = $region29
    $region28: #{basic_block_forward.1} parent=1 // pred_region
      %s263 = ssub.s32 256, 256
      %264 = vsyncadd [#allocation4], %s263
      %s265 = sshll.u32 [#allocation3], 4
      %s266 = int_to_ptr.vmem [resolvable:$true] %s265
      %271 = dma.vmem_to_hbm [thread:$0]  %s266, 256, %s6, [#allocation4], 128, 128, 8
    $region29: #{basic_block_forward.1} parent=1 // pred_fallthru
      _
    // Predicated region
    $region30: #{basic_block_forward.1} parent=1 // pred_check
      _
    $region31: #{basic_block_forward.1} parent=1 // pred_check_branch
      %273 = sbr.rel (0) target = $region33
    $region32: #{basic_block_forward.1} parent=1 // pred_region
      _
    $region33: #{basic_block_forward.1} parent=1 // pred_fallthru
      _
    // Predicated region
    $region34: #{basic_block_forward.1} parent=1 // pred_check
      _
    $region35: #{basic_block_forward.1} parent=1 // pred_check_branch
      %275 = sbr.rel (0) target = $region37
    $region36: #{basic_block_forward.1} parent=1 // pred_region
      %276 = dma.done [#allocation4], 256
    $region37: #{basic_block_forward.1} parent=1 // pred_fallthru
      _
    // Predicated region
    $region38: #{basic_block_forward.1} parent=1 // pred_check
      _
    $region39: #{basic_block_forward.1} parent=1 // pred_check_branch
      %278 = sbr.rel (0) target = $region41
    $region40: #{basic_block_forward.1} parent=1 // pred_region
      _
    $region41: #{basic_block_forward.1} parent=1 // pred_fallthru
      _
    %279 = vsyncpa [#allocation4], 1

</llo_original>
